<compile_context>
chip_gen: v7x
topology: tpu7x:2x2x1
jax: 0.10.0
libtpu: 0.0.40
codegen_flags: <defaults>
</compile_context>

<pallas_src>
import jax
import jax.numpy as jnp
from jax import lax
from jax.experimental import pallas as pl
from jax.experimental.pallas import tpu as pltpu

_BN_EPS = 1e-5


# ---------------------------------------------------------------------------
# Kernel
# ---------------------------------------------------------------------------
def task_head_kernel(x_ref,
                     w1_ref, b1_ref,
                     w2_ref, b2_ref,
                     wfh_ref, wfx_ref, bf_ref,
                     o_ref):
    x = x_ref[...]                                            # (TB, D), bf16
    # Fast path: x already bf16 (no cast).  Fallback cast stays on-chip.
    xw = x if x.dtype == jnp.bfloat16 else x.astype(jnp.bfloat16)

    # dense1 (BN1 folded into W/b) -> relu.  bf16 MXU operands, f32 accumulate,
    # f32 elementwise (bias, relu).
    h = jnp.dot(xw, w1_ref[...],
                preferred_element_type=jnp.float32) + b1_ref[...]
    h = jnp.maximum(h, 0.0)

    # dense2 (BN2 folded) -> relu.
    h = jnp.dot(h.astype(jnp.bfloat16), w2_ref[...],
                preferred_element_type=jnp.float32) + b2_ref[...]
    h = jnp.maximum(h, 0.0)

    # final_dense on concat([h, x], 1), N == 1.  Two separate K-contractions
    # (no H == D coupling), emitted directly as a lane-major (1, TB) row so the
    # output block is lane-dense.  f32 math; MXU slack makes this free.
    rh = lax.dot_general(wfh_ref[...], h, (((1,), (1,)), ((), ())),
                         preferred_element_type=jnp.float32)   # (1, TB)
    xf = x.astype(jnp.float32)
    rx = lax.dot_general(wfx_ref[...], xf, (((1,), (1,)), ((), ())),
                         preferred_element_type=jnp.float32)   # (1, TB)

    o_ref[...] = ((rh + rx + bf_ref[...])[None]).astype(o_ref.dtype)  # (1,1,TB)


# ---------------------------------------------------------------------------
# Tile selection
# ---------------------------------------------------------------------------
def _pick_tile_b(B, tile_cap):
    """Batch tile: big (amortize per-step overhead), >=2 steps for v7x megacore,
    and block == full array dims for small batches (no ragged edge at all)."""
    tile_cap = max(16, (tile_cap // 16) * 16)
    if B > tile_cap:
        return tile_cap                      # many tiles; last one may be ragged
    if B >= 64:
        # Split into (exactly) 2 grid steps so both v7x TensorCores get work.
        return min(B, ((pl.cdiv(B, 2) + 15) // 16) * 16)
    return B                                 # single block == full array dims


# ---------------------------------------------------------------------------
# Wrapper
# ---------------------------------------------------------------------------
def task_head_forward(x, kp, *, tile_b=1024):
    """x: (B, input_dim), ideally bf16 (cast fused into the upstream producer).
    kp: folded kernel params.  Returns (B, 1) float32."""
    B, D = x.shape
    H = kp["w1"].shape[1]

    tb = _pick_tile_b(B, tile_b)
    n_tiles = pl.cdiv(B, tb)

    flops = 2 * B * (D * H + H * H) + 2 * B * (H + D)
    bytes_accessed = (B * D * x.dtype.itemsize + B * 4      # x in, out
                      + (D * H + H * H) * 2                 # bf16 weights
                      + (3 * H + D + 1) * 4)                # biases / wf rows

    grid_spec = pltpu.PrefetchScalarGridSpec(
        num_scalar_prefetch=0,
        grid=(n_tiles,),
        in_specs=[
            pl.BlockSpec((tb, D), lambda i: (i, 0)),          # x tile (streamed)
            pl.BlockSpec((D, H), lambda i: (0, 0)),           # w1 (resident)
            pl.BlockSpec((1, H), lambda i: (0, 0)),           # b1
            pl.BlockSpec((H, H), lambda i: (0, 0)),           # w2
            pl.BlockSpec((1, H), lambda i: (0, 0)),           # b2
            pl.BlockSpec((1, H), lambda i: (0, 0)),           # wf_h row
            pl.BlockSpec((1, D), lambda i: (0, 0)),           # wf_x row
            pl.BlockSpec((1, 1), lambda i: (0, 0)),           # bf
        ],
        out_specs=pl.BlockSpec((1, 1, tb), lambda i: (i, 0, 0)),  # lane-dense
    )

    out = pl.pallas_call(
        task_head_kernel,
        out_shape=jax.ShapeDtypeStruct((n_tiles, 1, tb), jnp.float32),
        grid_spec=grid_spec,
        compiler_params=pltpu.CompilerParams(
            dimension_semantics=("parallel",)),
        cost_estimate=pl.CostEstimate(
            flops=flops, transcendentals=0, bytes_accessed=bytes_accessed),
    )(x, kp["w1"], kp["b1"], kp["w2"], kp["b2"],
      kp["wf_h"], kp["wf_x"], kp["bf"])

    # (n_tiles, 1, tb) -> (B, 1); rows past B (ragged last tile) are dropped.
    return out.reshape(n_tiles * tb, 1)[:B]


# ---------------------------------------------------------------------------
# Parameters (raw, PyTorch-like) + one-time folding into kernel layout
# ---------------------------------------------------------------------------
def make_params(key, input_dim, hidden_dim):
    """Raw parameters; shapes match the nn.Module (weights stored (in, out))."""
    ks = jax.random.split(key, 14)

    def lin(kw, kb, d_in, d_out):
        bound = 1.0 / (d_in ** 0.5)
        w = jax.random.uniform(kw, (d_in, d_out), jnp.float32, -bound, bound)
        b = jax.random.uniform(kb, (1, d_out), jnp.float32, -bound, bound)
        return w, b

    def bn(kg, kb, km, kv, dim):
        gamma = 1.0 + 0.1 * jax.random.normal(kg, (1, dim), jnp.float32)
        beta = 0.1 * jax.random.normal(kb, (1, dim), jnp.float32)
        mean = 0.1 * jax.random.normal(km, (1, dim), jnp.float32)
        var = jax.random.uniform(kv, (1, dim), jnp.float32, 0.5, 1.5)
        return gamma, beta, mean, var

    w1, b1 = lin(ks[0], ks[1], input_dim, hidden_dim)
    w2, b2 = lin(ks[2], ks[3], hidden_dim, hidden_dim)
    wf, bf = lin(ks[4], ks[5], input_dim + hidden_dim, 1)
    g1, be1, m1, v1 = bn(ks[6], ks[7], ks[8], ks[9], hidden_dim)
    g2, be2, m2, v2 = bn(ks[10], ks[11], ks[12], ks[13], hidden_dim)

    return {
        "w1": w1, "b1": b1, "w2": w2, "b2": b2, "wf": wf, "bf": bf,
        "bn1_gamma": g1, "bn1_beta": be1, "bn1_mean": m1, "bn1_var": v1,
        "bn2_gamma": g2, "bn2_beta": be2, "bn2_mean": m2, "bn2_var": v2,
    }


def fold_params(p):
    """One-time constant fold: BN(eval) into dense weights; wf split + transposed."""
    s1 = p["bn1_gamma"] / jnp.sqrt(p["bn1_var"] + _BN_EPS)
    t1 = p["bn1_beta"] - p["bn1_mean"] * s1
    s2 = p["bn2_gamma"] / jnp.sqrt(p["bn2_var"] + _BN_EPS)
    t2 = p["bn2_beta"] - p["bn2_mean"] * s2
    H = p["w1"].shape[1]
    return {
        "w1": (p["w1"] * s1).astype(jnp.bfloat16),   # (D, H) bf16
        "b1": p["b1"] * s1 + t1,                     # (1, H) f32
        "w2": (p["w2"] * s2).astype(jnp.bfloat16),   # (H, H) bf16
        "b2": p["b2"] * s2 + t2,                     # (1, H) f32
        "wf_h": p["wf"][:H, :].T,                    # (1, H) f32
        "wf_x": p["wf"][H:, :].T,                    # (1, D) f32
        "bf": p["bf"],                               # (1, 1) f32
    }


def reference_forward(x, p):
    """Pure-JAX f32 reference matching the PyTorch eval-mode forward."""
    s1 = p["bn1_gamma"] / jnp.sqrt(p["bn1_var"] + _BN_EPS)
    t1 = p["bn1_beta"] - p["bn1_mean"] * s1
    s2 = p["bn2_gamma"] / jnp.sqrt(p["bn2_var"] + _BN_EPS)
    t2 = p["bn2_beta"] - p["bn2_mean"] * s2
    h = x @ p["w1"] + p["b1"]
    h = jnp.maximum(h * s1 + t1, 0.0)
    h = h @ p["w2"] + p["b2"]
    h = jnp.maximum(h * s2 + t2, 0.0)
    cat = jnp.concatenate([h, x], axis=1)
    return cat @ p["wf"] + p["bf"]


if __name__ == "__main__":
    B, INPUT_DIM, HIDDEN_DIM = 12, 128, 128   # small, lane-aligned feature dims

    key = jax.random.PRNGKey(0)
    kx, kp = jax.random.split(key)
    x_f32 = jax.random.normal(kx, (B, INPUT_DIM), jnp.float32)
    # In production the upstream producer emits bf16 activations directly; the
    # cast here stands in for that (the forward wrapper itself never casts).
    x_bf16 = x_f32.astype(jnp.bfloat16)

    raw_params = make_params(kp, INPUT_DIM, HIDDEN_DIM)
    kernel_params = fold_params(raw_params)

    out = task_head_forward(x_bf16, kernel_params)
    out = jax.block_until_ready(out)

    ref = reference_forward(x_f32, raw_params)
    assert out.shape == (B, 1), out.shape
    # bf16 activations + bf16 MXU weights with f32 accumulation -> ~1e-2-level
    # agreement vs the f32 reference.
    assert jnp.allclose(out, ref, atol=5e-2, rtol=5e-2), (
        "mismatch vs reference: max abs diff = "
        f"{float(jnp.max(jnp.abs(out - ref)))}")

    print("KERNEL_OK")
</pallas_src>

<mosaic_0001>
module attributes {stable_mosaic.version = 11 : i64} {
  func.func @task_head_kernel(%arg0: i32, %arg1: memref<12x128xbf16, #tpu.memory_space<vmem>>, %arg2: memref<128x128xbf16, #tpu.memory_space<vmem>>, %arg3: memref<1x128xf32, #tpu.memory_space<vmem>>, %arg4: memref<128x128xbf16, #tpu.memory_space<vmem>>, %arg5: memref<1x128xf32, #tpu.memory_space<vmem>>, %arg6: memref<1x128xf32, #tpu.memory_space<vmem>>, %arg7: memref<1x128xf32, #tpu.memory_space<vmem>>, %arg8: memref<1x1xf32, #tpu.memory_space<vmem>>, %arg9: memref<1x1x12xf32, #tpu.memory_space<vmem>>) attributes {dimension_semantics = [#tpu.dimension_semantics<parallel>], iteration_bounds = array<i64: 1>, scalar_prefetch = 0 : i64, scratch_operands = 0 : i64, tpu.core_type = #tpu.core_type<tc>, window_params = [{transform_indices = @transform_0, window_bounds = array<i64: 12, 128>}, {pipeline_mode = #tpu.pipeline_mode<synchronous>, transform_indices = @transform_1, window_bounds = array<i64: 128, 128>}, {pipeline_mode = #tpu.pipeline_mode<synchronous>, transform_indices = @transform_2, window_bounds = array<i64: 1, 128>}, {pipeline_mode = #tpu.pipeline_mode<synchronous>, transform_indices = @transform_3, window_bounds = array<i64: 128, 128>}, {pipeline_mode = #tpu.pipeline_mode<synchronous>, transform_indices = @transform_4, window_bounds = array<i64: 1, 128>}, {pipeline_mode = #tpu.pipeline_mode<synchronous>, transform_indices = @transform_5, window_bounds = array<i64: 1, 128>}, {pipeline_mode = #tpu.pipeline_mode<synchronous>, transform_indices = @transform_6, window_bounds = array<i64: 1, 128>}, {pipeline_mode = #tpu.pipeline_mode<synchronous>, transform_indices = @transform_7, window_bounds = array<i64: 1, 1>}, {transform_indices = @transform_8, window_bounds = array<i64: 1, 1, 12>}]} {
    %c0 = arith.constant 0 : index
    %c0_0 = arith.constant 0 : index
    %0 = vector.load %arg1[%c0, %c0_0] : memref<12x128xbf16, #tpu.memory_space<vmem>>, vector<12x128xbf16>
    %c0_1 = arith.constant 0 : index
    %c0_2 = arith.constant 0 : index
    %1 = vector.load %arg2[%c0_1, %c0_2] : memref<128x128xbf16, #tpu.memory_space<vmem>>, vector<128x128xbf16>
    %cst = arith.constant dense<0.000000e+00> : vector<12x128xf32>
    %2 = tpu.matmul %0, %1, %cst {dimension_numbers = #tpu.dot_dimension_numbers<[1], [0], [0], [1], [0, 0, 1, 1], [], []>} : vector<12x128xbf16>, vector<128x128xbf16>, vector<12x128xf32> -> vector<12x128xf32>
    %c0_3 = arith.constant 0 : index
    %c0_4 = arith.constant 0 : index
    %3 = vector.load %arg3[%c0_3, %c0_4] : memref<1x128xf32, #tpu.memory_space<vmem>>, vector<1x128xf32>
    %4 = vector.broadcast %3 : vector<1x128xf32> to vector<12x128xf32>
    %5 = arith.addf %2, %4 : vector<12x128xf32>
    %cst_5 = arith.constant 0.000000e+00 : f32
    %6 = vector.broadcast %cst_5 : f32 to vector<12x128xf32>
    %7 = arith.maximumf %5, %6 : vector<12x128xf32>
    %8 = arith.truncf %7 : vector<12x128xf32> to vector<12x128xbf16>
    %c0_6 = arith.constant 0 : index
    %c0_7 = arith.constant 0 : index
    %9 = vector.load %arg4[%c0_6, %c0_7] : memref<128x128xbf16, #tpu.memory_space<vmem>>, vector<128x128xbf16>
    %cst_8 = arith.constant dense<0.000000e+00> : vector<12x128xf32>
    %10 = tpu.matmul %8, %9, %cst_8 {dimension_numbers = #tpu.dot_dimension_numbers<[1], [0], [0], [1], [0, 0, 1, 1], [], []>} : vector<12x128xbf16>, vector<128x128xbf16>, vector<12x128xf32> -> vector<12x128xf32>
    %c0_9 = arith.constant 0 : index
    %c0_10 = arith.constant 0 : index
    %11 = vector.load %arg5[%c0_9, %c0_10] : memref<1x128xf32, #tpu.memory_space<vmem>>, vector<1x128xf32>
    %12 = vector.broadcast %11 : vector<1x128xf32> to vector<12x128xf32>
    %13 = arith.addf %10, %12 : vector<12x128xf32>
    %cst_11 = arith.constant 0.000000e+00 : f32
    %14 = vector.broadcast %cst_11 : f32 to vector<12x128xf32>
    %15 = arith.maximumf %13, %14 : vector<12x128xf32>
    %c0_12 = arith.constant 0 : index
    %c0_13 = arith.constant 0 : index
    %16 = vector.load %arg6[%c0_12, %c0_13] : memref<1x128xf32, #tpu.memory_space<vmem>>, vector<1x128xf32>
    %cst_14 = arith.constant dense<0.000000e+00> : vector<1x12xf32>
    %17 = tpu.matmul %16, %15, %cst_14 {dimension_numbers = #tpu.dot_dimension_numbers<[1], [1], [0], [0], [0, 0, 1, 0], [], []>} : vector<1x128xf32>, vector<12x128xf32>, vector<1x12xf32> -> vector<1x12xf32>
    %18 = arith.extf %0 : vector<12x128xbf16> to vector<12x128xf32>
    %c0_15 = arith.constant 0 : index
    %c0_16 = arith.constant 0 : index
    %19 = vector.load %arg7[%c0_15, %c0_16] : memref<1x128xf32, #tpu.memory_space<vmem>>, vector<1x128xf32>
    %cst_17 = arith.constant dense<0.000000e+00> : vector<1x12xf32>
    %20 = tpu.matmul %19, %18, %cst_17 {dimension_numbers = #tpu.dot_dimension_numbers<[1], [1], [0], [0], [0, 0, 1, 0], [], []>} : vector<1x128xf32>, vector<12x128xf32>, vector<1x12xf32> -> vector<1x12xf32>
    %21 = arith.addf %17, %20 : vector<1x12xf32>
    %c0_18 = arith.constant 0 : index
    %c0_19 = arith.constant 0 : index
    %22 = vector.load %arg8[%c0_18, %c0_19] : memref<1x1xf32, #tpu.memory_space<vmem>>, vector<1x1xf32>
    %23 = vector.broadcast %22 : vector<1x1xf32> to vector<1x12xf32>
    %24 = arith.addf %21, %23 : vector<1x12xf32>
    %25 = vector.shape_cast %24 : vector<1x12xf32> to vector<1x1x12xf32>
    %c0_20 = arith.constant 0 : index
    %c0_21 = arith.constant 0 : index
    %c0_22 = arith.constant 0 : index
    %26 = vector.load %arg9[%c0_20, %c0_21, %c0_22] : memref<1x1x12xf32, #tpu.memory_space<vmem>>, vector<1x1x12xf32>
    tpu.vector_store %arg9[%c0_20, %c0_21, %c0_22], %25 {strides = array<i32>} : memref<1x1x12xf32, #tpu.memory_space<vmem>>, vector<1x1x12xf32>,
    return
  }
  func.func @transform_0(%arg0: i32) -> (i32, i32) {
    %c0_i32 = arith.constant 0 : i32
    %c0_i32_0 = arith.constant 0 : i32
    return %arg0, %c0_i32 : i32, i32
  }
  func.func @transform_1(%arg0: i32) -> (i32, i32) {
    %c0_i32 = arith.constant 0 : i32
    %c0_i32_0 = arith.constant 0 : i32
    %c0_i32_1 = arith.constant 0 : i32
    return %c0_i32, %c0_i32_0 : i32, i32
  }
  func.func @transform_2(%arg0: i32) -> (i32, i32) {
    %c0_i32 = arith.constant 0 : i32
    %c0_i32_0 = arith.constant 0 : i32
    %c0_i32_1 = arith.constant 0 : i32
    return %c0_i32, %c0_i32_0 : i32, i32
  }
  func.func @transform_3(%arg0: i32) -> (i32, i32) {
    %c0_i32 = arith.constant 0 : i32
    %c0_i32_0 = arith.constant 0 : i32
    %c0_i32_1 = arith.constant 0 : i32
    return %c0_i32, %c0_i32_0 : i32, i32
  }
  func.func @transform_4(%arg0: i32) -> (i32, i32) {
    %c0_i32 = arith.constant 0 : i32
    %c0_i32_0 = arith.constant 0 : i32
    %c0_i32_1 = arith.constant 0 : i32
    return %c0_i32, %c0_i32_0 : i32, i32
  }
  func.func @transform_5(%arg0: i32) -> (i32, i32) {
    %c0_i32 = arith.constant 0 : i32
    %c0_i32_0 = arith.constant 0 : i32
    %c0_i32_1 = arith.constant 0 : i32
    return %c0_i32, %c0_i32_0 : i32, i32
  }
  func.func @transform_6(%arg0: i32) -> (i32, i32) {
    %c0_i32 = arith.constant 0 : i32
    %c0_i32_0 = arith.constant 0 : i32
    %c0_i32_1 = arith.constant 0 : i32
    return %c0_i32, %c0_i32_0 : i32, i32
  }
  func.func @transform_7(%arg0: i32) -> (i32, i32) {
    %c0_i32 = arith.constant 0 : i32
    %c0_i32_0 = arith.constant 0 : i32
    %c0_i32_1 = arith.constant 0 : i32
    return %c0_i32, %c0_i32_0 : i32, i32
  }
  func.func @transform_8(%arg0: i32) -> (i32, i32, i32) {
    %c0_i32 = arith.constant 0 : i32
    %c0_i32_0 = arith.constant 0 : i32
    %c0_i32_1 = arith.constant 0 : i32
    return %arg0, %c0_i32, %c0_i32_0 : i32, i32, i32
  }
}

</mosaic_0001>

<llo_original>
// kernel: tpu_custom_call.1
$region0: #{tpu_custom_call.1}
  #allocation0 [shape = 'u32[]', space=smem, size = 0x4, offset = 0x4, fixed_abs, tag = 'smem constant byte address 0x4 - core index']
  #allocation1 [shape = 'u32[144,128]{1,0:T(1,128)}', space=vmem, size = 0x12000, scoped, tag = 'internal scratch']
  #allocation2 [shape = 'f32[1,1]{1,0:T(1,128)S(1)}', space=vmem, size = 0x200, scoped, tag = 'scoped memory for tpu_custom_call.1']
  %s0 = inlined_call_operand.hbm [shape: bf16[12,128], index: 0, kind: input, shape index: {}]
  %s1 = inlined_call_operand.hbm [shape: bf16[128,128], index: 1, kind: input, shape index: {}]
  %s2 = inlined_call_operand.vmem [shape: f32[1,128], index: 2, kind: input, shape index: {}]
  %s3 = inlined_call_operand.hbm [shape: bf16[128,128], index: 3, kind: input, shape index: {}]
  %s4 = inlined_call_operand.vmem [shape: f32[1,128], index: 4, kind: input, shape index: {}]
  %s5 = inlined_call_operand.vmem [shape: f32[1,128], index: 5, kind: input, shape index: {}]
  %s6 = inlined_call_operand.vmem [shape: f32[1,128], index: 6, kind: input, shape index: {}]
  %s7 = inlined_call_operand.<no memory space> [shape: f32[1,1], index: 7, kind: input, shape index: {}]
  %s8 = inlined_call_operand.hbm [shape: f32[1,1,12], index: 8, kind: output, shape index: {}]
  %s9 = sld [smem:[#allocation0]]
  $region54: #{tpu_custom_call.1} parent=0
    _
  %s11 = ssub.s32 1, %s9
  %s12 = scalar_select 0, %s11, %s9
  %v13 = vstv %s7
  %14 = vst [vmem:[#allocation2] sm:$0x1] %v13
  $region1: #{tpu_custom_call.1} parent=0
    #allocation3 [shape = 'u8[4096]{0}', space=vmem, size = 0x1000, scoped, tag = 'input window, operand 0, single buffered']
    #allocation4 [shape = 's32[1]{0}', space=sflag, size = 0x4, scoped, tag = 'scoped memory for tpu_custom_call.1']
    #allocation5 [shape = 's32[1]{0}', space=sflag, size = 0x4, scoped, tag = 'scoped memory for tpu_custom_call.1']
    #allocation6 [shape = 'u8[32768]{0}', space=vmem, size = 0x8000, scoped, tag = 'input window, operand 1, single buffered']
    #allocation7 [shape = 's32[1]{0}', space=sflag, size = 0x4, scoped, tag = 'scoped memory for tpu_custom_call.1']
    #allocation8 [shape = 'u8[32768]{0}', space=vmem, size = 0x8000, scoped, tag = 'input window, operand 3, single buffered']
    #allocation9 [shape = 'u8[512]{0}', space=vmem, size = 0x400, scoped, tag = 'output window, operand 0, single buffered']
    %15 = vsyncpa [#allocation4], 0
    %16 = vsyncpa [#allocation7], 0
    %17 = vsyncpa [#allocation5], 0
    // Predicated region
    $region2: #{tpu_custom_call.1} parent=1 // pred_check
      _
    $region3: #{tpu_custom_call.1} parent=1 // pred_check_branch
      %19 = sbr.rel (0) target = $region5
    $region4: #{tpu_custom_call.1} parent=1 // pred_region
      %s21 = ssub.s32 128, 128
      %22 = vsyncadd [#allocation4], %s21
      %s23 = sshll.u32 [#allocation3], 4
      %s24 = int_to_ptr.vmem [resolvable:$true] %s23
      %29 = dma.hbm_to_vmem [thread:$0]  %s0, 128, %s24, [#allocation4], 64, 64, 4
    $region5: #{tpu_custom_call.1} parent=1 // pred_fallthru
      _
    // Predicated region
    $region6: #{tpu_custom_call.1} parent=1 // pred_check
      _
    $region7: #{tpu_custom_call.1} parent=1 // pred_check_branch
      %31 = sbr.rel (0) target = $region9
    $region8: #{tpu_custom_call.1} parent=1 // pred_region
      %s33 = ssub.s32 1024, 1024
      %34 = vsyncadd [#allocation7], %s33
      %s35 = sshll.u32 [#allocation6], 4
      %s36 = int_to_ptr.vmem [resolvable:$true] %s35
      %41 = dma.hbm_to_vmem [thread:$0]  %s1, 1024, %s36, [#allocation7], 64, 64, 4
    $region9: #{tpu_custom_call.1} parent=1 // pred_fallthru
      _
    // Predicated region
    $region10: #{tpu_custom_call.1} parent=1 // pred_check
      _
    $region11: #{tpu_custom_call.1} parent=1 // pred_check_branch
      %43 = sbr.rel (0) target = $region13
    $region12: #{tpu_custom_call.1} parent=1 // pred_region
      _
    $region13: #{tpu_custom_call.1} parent=1 // pred_fallthru
      _
    // Predicated region
    $region14: #{tpu_custom_call.1} parent=1 // pred_check
      _
    $region15: #{tpu_custom_call.1} parent=1 // pred_check_branch
      %45 = sbr.rel (0) target = $region17
    $region16: #{tpu_custom_call.1} parent=1 // pred_region
      %s47 = ssub.s32 1024, 1024
      %48 = vsyncadd [#allocation7], %s47
      %s49 = sshll.u32 [#allocation8], 4
      %s50 = int_to_ptr.vmem [resolvable:$true] %s49
      %55 = dma.hbm_to_vmem [thread:$0]  %s3, 1024, %s50, [#allocation7], 64, 64, 4
    $region17: #{tpu_custom_call.1} parent=1 // pred_fallthru
      _
    // Predicated region
    $region18: #{tpu_custom_call.1} parent=1 // pred_check
      _
    $region19: #{tpu_custom_call.1} parent=1 // pred_check_branch
      %57 = sbr.rel (0) target = $region21
    $region20: #{tpu_custom_call.1} parent=1 // pred_region
      _
    $region21: #{tpu_custom_call.1} parent=1 // pred_fallthru
      _
    // Predicated region
    $region22: #{tpu_custom_call.1} parent=1 // pred_check
      _
    $region23: #{tpu_custom_call.1} parent=1 // pred_check_branch
      %59 = sbr.rel (0) target = $region25
    $region24: #{tpu_custom_call.1} parent=1 // pred_region
      _
    $region25: #{tpu_custom_call.1} parent=1 // pred_fallthru
      _
    // Predicated region
    $region26: #{tpu_custom_call.1} parent=1 // pred_check
      _
    $region27: #{tpu_custom_call.1} parent=1 // pred_check_branch
      %61 = sbr.rel (0) target = $region29
    $region28: #{tpu_custom_call.1} parent=1 // pred_region
      _
    $region29: #{tpu_custom_call.1} parent=1 // pred_fallthru
      _
    // Predicated region
    $region30: #{tpu_custom_call.1} parent=1 // pred_check
      _
    $region31: #{tpu_custom_call.1} parent=1 // pred_check_branch
      %63 = sbr.rel (0) target = $region33
    $region32: #{tpu_custom_call.1} parent=1 // pred_region
      _
    $region33: #{tpu_custom_call.1} parent=1 // pred_fallthru
      _
    // Predicated region
    $region34: #{tpu_custom_call.1} parent=1 // pred_check
      _
    $region35: #{tpu_custom_call.1} parent=1 // pred_check_branch
      %65 = sbr.rel (0) target = $region37
    $region36: #{tpu_custom_call.1} parent=1 // pred_region
      %66 = dma.done [#allocation4], 128
    $region37: #{tpu_custom_call.1} parent=1 // pred_fallthru
      _
    // Predicated region
    $region38: #{tpu_custom_call.1} parent=1 // pred_check
      _
    $region39: #{tpu_custom_call.1} parent=1 // pred_check_branch
      %68 = sbr.rel (0) target = $region41
    $region40: #{tpu_custom_call.1} parent=1 // pred_region
      %69 = dma.done [#allocation7], 1024
    $region41: #{tpu_custom_call.1} parent=1 // pred_fallthru
      _
    // Predicated region
    $region42: #{tpu_custom_call.1} parent=1 // pred_check
      _
    $region43: #{tpu_custom_call.1} parent=1 // pred_check_branch
      %71 = sbr.rel (0) target = $region45
    $region44: #{tpu_custom_call.1} parent=1 // pred_region
      %72 = dma.done [#allocation7], 1024
    $region45: #{tpu_custom_call.1} parent=1 // pred_fallthru
      _
    %v74 = vld [vmem:[#allocation3] sm:$0xf]
    %v75 = vld [vmem:[#allocation3 + $0x4] sm:$0x3]
    %v76 = vld [vmem:[#allocation6] sm:$0xf]
    %v77 = vld [vmem:[#allocation6 + $0x4] sm:$0xf]
    %v78 = vld [vmem:[#allocation6 + $0x8] sm:$0xf]
    %v79 = vld [vmem:[#allocation6 + $0xc] sm:$0xf]
    %v80 = vld [vmem:[#allocation6 + $0x10] sm:$0xf]
    %v81 = vld [vmem:[#allocation6 + $0x14] sm:$0xf]
    %v82 = vld [vmem:[#allocation6 + $0x18] sm:$0xf]
    %v83 = vld [vmem:[#allocation6 + $0x1c] sm:$0xf]
    %v84 = vld [vmem:[#allocation6 + $0x20] sm:$0xf]
    %v85 = vld [vmem:[#allocation6 + $0x24] sm:$0xf]
    %v86 = vld [vmem:[#allocation6 + $0x28] sm:$0xf]
    %v87 = vld [vmem:[#allocation6 + $0x2c] sm:$0xf]
    %v88 = vld [vmem:[#allocation6 + $0x30] sm:$0xf]
    %v89 = vld [vmem:[#allocation6 + $0x34] sm:$0xf]
    %v90 = vld [vmem:[#allocation6 + $0x38] sm:$0xf]
    %v91 = vld [vmem:[#allocation6 + $0x3c] sm:$0xf]
    %v92 = vld [vmem:[%s2] sm:$0x1]
    %v94 = vlaneseq
    %v95 = vshrl.u32 %v94, 7
    %v96 = vsub.s32 0, %v95
    %v97 = vrot.slane %v92, %v96
    %v101 = vunpack.c.l.b16 %v74
    %v102 = vunpack.c.l.b16 %v75
    %v103 = vpack.c.b16 %v102, %v101
    %v121 = vunpack.c.l.b16 %v76
    %v122 = vunpack.c.l.b16 %v77
    %v123 = vunpack.c.l.b16 %v78
    %v124 = vunpack.c.l.b16 %v79
    %v125 = vunpack.c.l.b16 %v80
    %v126 = vunpack.c.l.b16 %v81
    %v127 = vunpack.c.l.b16 %v82
    %v128 = vunpack.c.l.b16 %v83
    %v129 = vunpack.c.l.b16 %v84
    %v130 = vunpack.c.l.b16 %v85
    %v131 = vunpack.c.l.b16 %v86
    %v132 = vunpack.c.l.b16 %v87
    %v133 = vunpack.c.l.b16 %v88
    %v134 = vunpack.c.l.b16 %v89
    %v135 = vunpack.c.l.b16 %v90
    %v136 = vunpack.c.l.b16 %v91
    %v137 = vpack.c.b16 %v122, %v121
    %v138 = vpack.c.b16 %v124, %v123
    %v139 = vpack.c.b16 %v126, %v125
    %v140 = vpack.c.b16 %v128, %v127
    %v141 = vpack.c.b16 %v130, %v129
    %v142 = vpack.c.b16 %v132, %v131
    %v143 = vpack.c.b16 %v134, %v133
    %v144 = vpack.c.b16 %v136, %v135
    %153 = vmatprep.subr.bf16.mxu0 0
    %154 = vmatpush1.bf16.msra.mxu0 %v137
    %155 = vmatprep.subr.bf16.mxu0 0
    %156 = vmatpush1.bf16.msra.mxu0 %v138
    %157 = vmatprep.subr.bf16.mxu0 0
    %158 = vmatpush1.bf16.msra.mxu0 %v139
    %159 = vmatprep.subr.bf16.mxu0 0
    %160 = vmatpush1.bf16.msra.mxu0 %v140
    %161 = vmatprep.subr.bf16.mxu0 0
    %162 = vmatpush1.bf16.msra.mxu0 %v141
    %163 = vmatprep.subr.bf16.mxu0 0
    %164 = vmatpush1.bf16.msra.mxu0 %v142
    %165 = vmatprep.subr.bf16.mxu0 0
    %166 = vmatpush1.bf16.msra.mxu0 %v143
    %167 = vmatprep.subr.bf16.mxu0 0
    %168 = vmatpush1.bf16.msra.mxu0 %v144
    %169 = vmatprep.subr.bf16.mxu0 0
    %170 = vmatpush1.bf16.msra.mxu0 0
    %171 = vmatprep.subr.bf16.mxu0 0
    %172 = vmatpush1.bf16.msra.mxu0 0
    %173 = vmatprep.subr.bf16.mxu0 0
    %174 = vmatpush1.bf16.msra.mxu0 0
    %175 = vmatprep.subr.bf16.mxu0 0
    %176 = vmatpush1.bf16.msra.mxu0 0
    %177 = vmatprep.subr.bf16.mxu0 0
    %178 = vmatpush1.bf16.msra.mxu0 0
    %179 = vmatprep.subr.bf16.mxu0 0
    %180 = vmatpush1.bf16.msra.mxu0 0
    %181 = vmatprep.subr.bf16.mxu0 0
    %182 = vmatpush1.bf16.msra.mxu0 0
    %183 = vmatprep.subr.bf16.mxu0 0
    %184 = vmatpush1.bf16.msra.mxu0 0
    %185 = vmatprep.mubr.bf16.mxu0 0
    %186 = vmatmul.mubr.bf16.gmra.mrb[0].mxu0 %v103
    %v187 = vpop.f32.mrb[0].mxu0
    %v188 = vadd.f32 %v97, %v187
    %v189 = vpop.f32.mrb[0].mxu0
    %v190 = vpop.f32.mrb[0].mxu0
    %v191 = vadd.f32 %v97, %v190
    %v192 = vpop.f32.mrb[0].mxu0
    %193 = vdwg.mxu0
    %v194 = vmax.f32 %v188, 0.0
    %v195 = vmax.f32 %v191, 0.0
    %v196 = vpack.c.bf16 %v195, %v194
    %v197 = vld [vmem:[#allocation8] sm:$0xf]
    %v198 = vld [vmem:[#allocation8 + $0x4] sm:$0xf]
    %v199 = vld [vmem:[#allocation8 + $0x8] sm:$0xf]
    %v200 = vld [vmem:[#allocation8 + $0xc] sm:$0xf]
    %v201 = vld [vmem:[#allocation8 + $0x10] sm:$0xf]
    %v202 = vld [vmem:[#allocation8 + $0x14] sm:$0xf]
    %v203 = vld [vmem:[#allocation8 + $0x18] sm:$0xf]
    %v204 = vld [vmem:[#allocation8 + $0x1c] sm:$0xf]
    %v205 = vld [vmem:[#allocation8 + $0x20] sm:$0xf]
    %v206 = vld [vmem:[#allocation8 + $0x24] sm:$0xf]
    %v207 = vld [vmem:[#allocation8 + $0x28] sm:$0xf]
    %v208 = vld [vmem:[#allocation8 + $0x2c] sm:$0xf]
    %v209 = vld [vmem:[#allocation8 + $0x30] sm:$0xf]
    %v210 = vld [vmem:[#allocation8 + $0x34] sm:$0xf]
    %v211 = vld [vmem:[#allocation8 + $0x38] sm:$0xf]
    %v212 = vld [vmem:[#allocation8 + $0x3c] sm:$0xf]
    %v213 = vld [vmem:[%s4] sm:$0x1]
    %v215 = vlaneseq
    %v216 = vshrl.u32 %v215, 7
    %v217 = vsub.s32 0, %v216
    %v218 = vrot.slane %v213, %v217
    %v236 = vunpack.c.l.b16 %v197
    %v237 = vunpack.c.l.b16 %v198
    %v238 = vunpack.c.l.b16 %v199
    %v239 = vunpack.c.l.b16 %v200
    %v240 = vunpack.c.l.b16 %v201
    %v241 = vunpack.c.l.b16 %v202
    %v242 = vunpack.c.l.b16 %v203
    %v243 = vunpack.c.l.b16 %v204
    %v244 = vunpack.c.l.b16 %v205
    %v245 = vunpack.c.l.b16 %v206
    %v246 = vunpack.c.l.b16 %v207
    %v247 = vunpack.c.l.b16 %v208
    %v248 = vunpack.c.l.b16 %v209
    %v249 = vunpack.c.l.b16 %v210
    %v250 = vunpack.c.l.b16 %v211
    %v251 = vunpack.c.l.b16 %v212
    %v252 = vpack.c.b16 %v237, %v236
    %v253 = vpack.c.b16 %v239, %v238
    %v254 = vpack.c.b16 %v241, %v240
    %v255 = vpack.c.b16 %v243, %v242
    %v256 = vpack.c.b16 %v245, %v244
    %v257 = vpack.c.b16 %v247, %v246
    %v258 = vpack.c.b16 %v249, %v248
    %v259 = vpack.c.b16 %v251, %v250
    %268 = vmatprep.subr.bf16.mxu0 0
    %269 = vmatpush1.bf16.msra.mxu0 %v252
    %270 = vmatprep.subr.bf16.mxu0 0
    %271 = vmatpush1.bf16.msra.mxu0 %v253
    %272 = vmatprep.subr.bf16.mxu0 0
    %273 = vmatpush1.bf16.msra.mxu0 %v254
    %274 = vmatprep.subr.bf16.mxu0 0
    %275 = vmatpush1.bf16.msra.mxu0 %v255
    %276 = vmatprep.subr.bf16.mxu0 0
    %277 = vmatpush1.bf16.msra.mxu0 %v256
    %278 = vmatprep.subr.bf16.mxu0 0
    %279 = vmatpush1.bf16.msra.mxu0 %v257
    %280 = vmatprep.subr.bf16.mxu0 0
    %281 = vmatpush1.bf16.msra.mxu0 %v258
    %282 = vmatprep.subr.bf16.mxu0 0
    %283 = vmatpush1.bf16.msra.mxu0 %v259
    %284 = vmatprep.subr.bf16.mxu0 0
    %285 = vmatpush1.bf16.msra.mxu0 0
    %286 = vmatprep.subr.bf16.mxu0 0
    %287 = vmatpush1.bf16.msra.mxu0 0
    %288 = vmatprep.subr.bf16.mxu0 0
    %289 = vmatpush1.bf16.msra.mxu0 0
    %290 = vmatprep.subr.bf16.mxu0 0
    %291 = vmatpush1.bf16.msra.mxu0 0
    %292 = vmatprep.subr.bf16.mxu0 0
    %293 = vmatpush1.bf16.msra.mxu0 0
    %294 = vmatprep.subr.bf16.mxu0 0
    %295 = vmatpush1.bf16.msra.mxu0 0
    %296 = vmatprep.subr.bf16.mxu0 0
    %297 = vmatpush1.bf16.msra.mxu0 0
    %298 = vmatprep.subr.bf16.mxu0 0
    %299 = vmatpush1.bf16.msra.mxu0 0
    %300 = vmatprep.mubr.bf16.mxu0 0
    %301 = vmatmul.mubr.bf16.gmra.mrb[0].mxu0 %v196
    %v302 = vpop.f32.mrb[0].mxu0
    %v303 = vadd.f32 %v218, %v302
    %v304 = vpop.f32.mrb[0].mxu0
    %v305 = vpop.f32.mrb[0].mxu0
    %v306 = vadd.f32 %v218, %v305
    %v307 = vpop.f32.mrb[0].mxu0
    %308 = vdwg.mxu0
    %v309 = vmax.f32 %v303, 0.0
    %v310 = vmax.f32 %v306, 0.0
    %v311 = vld [vmem:[%s5] sm:$0x1]
    %v312 = vunpack.c.l.bf16 %v74
    %v313 = vunpack.c.l.bf16 %v75
    %v314 = vld [vmem:[%s6] sm:$0x1]
    %315 = vmatprep.subr.mxu0 0.0
    %316 = vmatpush1.xpose.msra.mxu0 %v312
    %317 = vmatprep.subr.mxu0 0.0
    %318 = vmatpush1.xpose.msra.mxu0 %v313
    %319 = vmatprep.subr.mxu0 0.0
    %320 = vmatpush1.xpose.msra.mxu0 0.0
    %321 = vmatprep.subr.mxu0 0.0
    %322 = vmatpush1.xpose.msra.mxu0 0.0
    %323 = vmatprep.subr.mxu0 0.0
    %324 = vmatpush1.xpose.msra.mxu0 0.0
    %325 = vmatprep.subr.mxu0 0.0
    %326 = vmatpush1.xpose.msra.mxu0 0.0
    %327 = vmatprep.subr.mxu0 0.0
    %328 = vmatpush1.xpose.msra.mxu0 0.0
    %329 = vmatprep.subr.mxu0 0.0
    %330 = vmatpush1.xpose.msra.mxu0 0.0
    %331 = vmatprep.subr.mxu0 0.0
    %332 = vmatpush1.xpose.msra.mxu0 0.0
    %333 = vmatprep.subr.mxu0 0.0
    %334 = vmatpush1.xpose.msra.mxu0 0.0
    %335 = vmatprep.subr.mxu0 0.0
    %336 = vmatpush1.xpose.msra.mxu0 0.0
    %337 = vmatprep.subr.mxu0 0.0
    %338 = vmatpush1.xpose.msra.mxu0 0.0
    %339 = vmatprep.subr.mxu0 0.0
    %340 = vmatpush1.xpose.msra.mxu0 0.0
    %341 = vmatprep.subr.mxu0 0.0
    %342 = vmatpush1.xpose.msra.mxu0 0.0
    %343 = vmatprep.subr.mxu0 0.0
    %344 = vmatpush1.xpose.msra.mxu0 0.0
    %345 = vmatprep.subr.mxu0 0.0
    %346 = vmatpush1.xpose.msra.mxu0 0.0
    %347 = vmatprep.subr.mxu0 0.0
    %348 = vmatpush1.xpose.msra.mxu0 0.0
    %349 = vmatprep.subr.mxu0 0.0
    %350 = vmatpush1.xpose.msra.mxu0 0.0
    %351 = vmatprep.subr.mxu0 0.0
    %352 = vmatpush1.xpose.msra.mxu0 0.0
    %353 = vmatprep.subr.mxu0 0.0
    %354 = vmatpush1.xpose.msra.mxu0 0.0
    %355 = vmatprep.subr.mxu0 0.0
    %356 = vmatpush1.xpose.msra.mxu0 0.0
    %357 = vmatprep.subr.mxu0 0.0
    %358 = vmatpush1.xpose.msra.mxu0 0.0
    %359 = vmatprep.subr.mxu0 0.0
    %360 = vmatpush1.xpose.msra.mxu0 0.0
    %361 = vmatprep.subr.mxu0 0.0
    %362 = vmatpush1.xpose.msra.mxu0 0.0
    %363 = vmatprep.subr.mxu0 0.0
    %364 = vmatpush1.xpose.msra.mxu0 0.0
    %365 = vmatprep.subr.mxu0 0.0
    %366 = vmatpush1.xpose.msra.mxu0 0.0
    %367 = vmatprep.subr.mxu0 0.0
    %368 = vmatpush1.xpose.msra.mxu0 0.0
    %369 = vmatprep.subr.mxu0 0.0
    %370 = vmatpush1.xpose.msra.mxu0 0.0
    %371 = vmatprep.subr.mxu0 0.0
    %372 = vmatpush1.xpose.msra.mxu0 0.0
    %373 = vmatprep.subr.mxu0 0.0
    %374 = vmatpush1.xpose.msra.mxu0 0.0
    %375 = vmatprep.subr.mxu0 0.0
    %376 = vmatpush1.xpose.msra.mxu0 0.0
    %377 = vmatprep.subr.mxu0 0.0
    %378 = vmatpush1.xpose.msra.mxu0 0.0
    %379 = vmatprep.mubr.f32.mxu0 0.0
    %380 = vmatmul.mubr.f32.gmra.mrb[0].mxu0 %v314
    %v381 = vpop.f32.mrb[0].mxu0
    %v382 = vadd.f32 0.0, %v381
    %v383 = vpop.f32.mrb[0].mxu0
    %384 = vdwg.mxu0
    %385 = vmatprep.subr.mxu0 0.0
    %386 = vmatpush1.xpose.msra.mxu0 %v309
    %387 = vmatprep.subr.mxu0 0.0
    %388 = vmatpush1.xpose.msra.mxu0 %v310
    %389 = vmatprep.subr.mxu0 0.0
    %390 = vmatpush1.xpose.msra.mxu0 0.0
    %391 = vmatprep.subr.mxu0 0.0
    %392 = vmatpush1.xpose.msra.mxu0 0.0
    %393 = vmatprep.subr.mxu0 0.0
    %394 = vmatpush1.xpose.msra.mxu0 0.0
    %395 = vmatprep.subr.mxu0 0.0
    %396 = vmatpush1.xpose.msra.mxu0 0.0
    %397 = vmatprep.subr.mxu0 0.0
    %398 = vmatpush1.xpose.msra.mxu0 0.0
    %399 = vmatprep.subr.mxu0 0.0
    %400 = vmatpush1.xpose.msra.mxu0 0.0
    %401 = vmatprep.subr.mxu0 0.0
    %402 = vmatpush1.xpose.msra.mxu0 0.0
    %403 = vmatprep.subr.mxu0 0.0
    %404 = vmatpush1.xpose.msra.mxu0 0.0
    %405 = vmatprep.subr.mxu0 0.0
    %406 = vmatpush1.xpose.msra.mxu0 0.0
    %407 = vmatprep.subr.mxu0 0.0
    %408 = vmatpush1.xpose.msra.mxu0 0.0
    %409 = vmatprep.subr.mxu0 0.0
    %410 = vmatpush1.xpose.msra.mxu0 0.0
    %411 = vmatprep.subr.mxu0 0.0
    %412 = vmatpush1.xpose.msra.mxu0 0.0
    %413 = vmatprep.subr.mxu0 0.0
    %414 = vmatpush1.xpose.msra.mxu0 0.0
    %415 = vmatprep.subr.mxu0 0.0
    %416 = vmatpush1.xpose.msra.mxu0 0.0
    %417 = vmatprep.subr.mxu0 0.0
    %418 = vmatpush1.xpose.msra.mxu0 0.0
    %419 = vmatprep.subr.mxu0 0.0
    %420 = vmatpush1.xpose.msra.mxu0 0.0
    %421 = vmatprep.subr.mxu0 0.0
    %422 = vmatpush1.xpose.msra.mxu0 0.0
    %423 = vmatprep.subr.mxu0 0.0
    %424 = vmatpush1.xpose.msra.mxu0 0.0
    %425 = vmatprep.subr.mxu0 0.0
    %426 = vmatpush1.xpose.msra.mxu0 0.0
    %427 = vmatprep.subr.mxu0 0.0
    %428 = vmatpush1.xpose.msra.mxu0 0.0
    %429 = vmatprep.subr.mxu0 0.0
    %430 = vmatpush1.xpose.msra.mxu0 0.0
    %431 = vmatprep.subr.mxu0 0.0
    %432 = vmatpush1.xpose.msra.mxu0 0.0
    %433 = vmatprep.subr.mxu0 0.0
    %434 = vmatpush1.xpose.msra.mxu0 0.0
    %435 = vmatprep.subr.mxu0 0.0
    %436 = vmatpush1.xpose.msra.mxu0 0.0
    %437 = vmatprep.subr.mxu0 0.0
    %438 = vmatpush1.xpose.msra.mxu0 0.0
    %439 = vmatprep.subr.mxu0 0.0
    %440 = vmatpush1.xpose.msra.mxu0 0.0
    %441 = vmatprep.subr.mxu0 0.0
    %442 = vmatpush1.xpose.msra.mxu0 0.0
    %443 = vmatprep.subr.mxu0 0.0
    %444 = vmatpush1.xpose.msra.mxu0 0.0
    %445 = vmatprep.subr.mxu0 0.0
    %446 = vmatpush1.xpose.msra.mxu0 0.0
    %447 = vmatprep.subr.mxu0 0.0
    %448 = vmatpush1.xpose.msra.mxu0 0.0
    %449 = vmatprep.mubr.f32.mxu0 0.0
    %450 = vmatmul.mubr.f32.gmra.mrb[0].mxu0 %v311
    %v451 = vpop.f32.mrb[0].mxu0
    %v452 = vadd.f32 %v382, %v451
    %v453 = vpop.f32.mrb[0].mxu0
    %454 = vdwg.mxu0
    %v455 = vld [vmem:[#allocation2] sm:$0x1]
    %457 = vset.pattern.permute.xlu0 0
    %458 = vperm.xlu0 %457, %v455
    %v459 = vpop.permute.xlu0 %458
    %v461 = vlaneseq
    %v462 = vshrl.u32 %v461, 7
    %v463 = vsub.s32 0, %v462
    %v464 = vrot.slane %v459, %v463
    %v465 = vadd.f32 %v452, %v464
    %vm466 = vcmask 90112
    %467 = vst.msk [vmem:[#allocation9] sm:$0x1] %vm466, %v465
    // Predicated region
    $region46: #{tpu_custom_call.1} parent=1 // pred_check
      _
    $region47: #{tpu_custom_call.1} parent=1 // pred_check_branch
      %469 = sbr.rel (0) target = $region49
    $region48: #{tpu_custom_call.1} parent=1 // pred_region
      %s471 = ssub.s32 16, 16
      %472 = vsyncadd [#allocation5], %s471
      %s474 = sshll.u32 [#allocation9], 4
      %s475 = int_to_ptr.vmem [resolvable:$true] %s474
      %477 = dma.vmem_to_hbm [thread:$0]  %s475, 16, %s8, [#allocation5]
    $region49: #{tpu_custom_call.1} parent=1 // pred_fallthru
      _
    // Predicated region
    $region50: #{tpu_custom_call.1} parent=1 // pred_check
      _
    $region51: #{tpu_custom_call.1} parent=1 // pred_check_branch
      %479 = sbr.rel (0) target = $region53
    $region52: #{tpu_custom_call.1} parent=1 // pred_region
      %480 = dma.done [#allocation5], 16
    $region53: #{tpu_custom_call.1} parent=1 // pred_fallthru
      _
    %481 = vsyncpa [#allocation4], 1
    %482 = vsyncpa [#allocation7], 1
    %483 = vsyncpa [#allocation5], 1

</llo_original>
